<compile_context>
chip_gen: v7x
topology: tpu7x:2x2x1
jax: 0.10.0
libtpu: 0.0.40
codegen_flags: <defaults>
</compile_context>

<pallas_src>
import functools

import jax
import jax.numpy as jnp
from jax.experimental import pallas as pl
from jax.experimental.pallas import tpu as pltpu

LANE = 128
SUBLANE = 8
# Double-buffered (input block + output block) bytes we are willing to spend
# per grid step.  12 MiB fits under every chip's default scoped-VMEM limit
# (16 MiB v5e, 32 MiB v6e/v7x, 64 MiB physical on v7x), leaving headroom for
# the resident weight/bias tiles and pipeline bookkeeping.
_VMEM_TILE_BUDGET = 12 * 1024 * 1024
# Below this total footprint we skip the grid entirely (single shot, no
# pipelining bookkeeping) -- the ~0.35 us per-grid-step cost dominates tiny
# problems.
_SINGLE_SHOT_BUDGET = 2 * 1024 * 1024


def classifier_kernel(x_ref, w_ref, b_ref, o_ref):
    # MXU matmul (f32 accumulation) + f32 bias add + sigmoid, all in VMEM.
    h2y = jnp.dot(x_ref[...], w_ref[...], preferred_element_type=jnp.float32)
    h2y = h2y + b_ref[...]                     # bias is already f32, [1, PO]
    o_ref[...] = jax.nn.sigmoid(h2y).astype(o_ref.dtype)


def _round_up(x, m):
    return ((x + m - 1) // m) * m


@functools.partial(jax.jit, static_argnames=("block_rows",))
def classifier_forward(prev_h, weight_t, bias, *, block_rows=None):
    """prev_h: [B, H], weight_t: [H, O], bias: [1, O]  ->  pred: [B, O] f32.

    block_rows (optional, in *original* batch rows) overrides the VMEM-derived
    batch tile of the grid path.
    """
    B, H = prev_h.shape
    H2, O = weight_t.shape
    assert H == H2 and bias.shape == (1, O)
    in_dt = prev_h.dtype

    # Lane-dense repack factor: fold P batch rows into one packed row so the
    # matmul runs at K = P*H, N = P*O = 128 (lane-dense, unmasked stores)
    # instead of K=32, N=8.
    P = LANE // O if (LANE % O == 0 and O < LANE) else 1

    B_pad = _round_up(B, P)
    if B_pad != B:
        # Rare path (B not a multiple of P): one small wrapper-side pad.
        prev_h = jnp.pad(prev_h, ((0, B_pad - B), (0, 0)))
    Bp, PH, PO = B_pad // P, P * H, P * O

    x = prev_h.reshape(Bp, PH)                       # contiguous reshape: free
    if P > 1:
        # Block-diagonal weight: packed row chunk j only multiplies block j.
        w = jnp.kron(jnp.eye(P, dtype=weight_t.dtype), weight_t)   # [PH, PO]
        b = jnp.tile(bias, (1, P)).astype(jnp.float32)             # [1, PO]
    else:
        w = weight_t
        b = bias.astype(jnp.float32)
    # One-time cast of the tiny, VMEM-resident weight to match the streamed
    # input dtype (bf16-friendly if the producer already hands in bf16).
    w = w.astype(in_dt)

    out_shape = jax.ShapeDtypeStruct((Bp, PO), jnp.float32)
    footprint = (x.size * x.dtype.itemsize + Bp * PO * 4
                 + w.size * w.dtype.itemsize + b.size * 4)

    if block_rows is None and footprint <= _SINGLE_SHOT_BUDGET:
        # Single shot, no grid: everything fits trivially in VMEM, skip all
        # grid/pipelining machinery.
        out = pl.pallas_call(classifier_kernel, out_shape=out_shape)(x, w, b)
    else:
        if block_rows is not None:
            tbp = max(SUBLANE, _round_up(max(1, block_rows // P), SUBLANE))
        else:
            # Double-buffered input block + double-buffered output block.
            row_bytes = 2 * (PH * x.dtype.itemsize + PO * 4)
            tbp = max(SUBLANE,
                      (_VMEM_TILE_BUDGET // row_bytes) // SUBLANE * SUBLANE)
        # Keep at least 2 grid steps so dimension_semantics=("parallel",) can
        # actually give both TensorCores work (v7x megacore).
        half = max(SUBLANE, _round_up(pl.cdiv(Bp, 2), SUBLANE))
        tbp = min(tbp, half)

        out = pl.pallas_call(
            classifier_kernel,
            out_shape=out_shape,
            grid=(pl.cdiv(Bp, tbp),),
            in_specs=[
                pl.BlockSpec((tbp, PH), lambda i: (i, 0)),  # packed rows stream
                pl.BlockSpec((PH, PO), lambda i: (0, 0)),   # weight VMEM-resident
                pl.BlockSpec((1, PO), lambda i: (0, 0)),    # bias VMEM-resident
            ],
            out_specs=pl.BlockSpec((tbp, PO), lambda i: (i, 0)),
            compiler_params=pltpu.CompilerParams(
                dimension_semantics=("parallel",),
            ),
        )(x, w, b)
        # Note: if Bp % tbp != 0, the last step's sigmoid also runs over padded
        # tail rows; their out-of-bounds writes are dropped, so visible output
        # is correct.

    pred = out.reshape(B_pad, O)
    if B_pad != B:
        pred = pred[:B]
    return pred


if __name__ == "__main__":
    # opt-equivalent hyperparameters
    hidden_size = 32      # opt.hidden_size
    output_size = 8       # opt.output_size
    init_weight = 0.08    # opt.init_weight
    # opt.dropout = 0

    key = jax.random.PRNGKey(0)
    k_x, k_w, k_b, k_mid, k_odd = jax.random.split(key, 5)

    # init.uniform_(-init_weight, init_weight); PyTorch weight is [O, H],
    # we keep its transpose [H, O] for a lane-friendly kernel layout.
    weight = jax.random.uniform(
        k_w, (output_size, hidden_size), jnp.float32,
        minval=-init_weight, maxval=init_weight)
    weight_t = weight.T                                   # [H, O]
    bias = jax.random.uniform(
        k_b, (1, output_size), jnp.float32,
        minval=-init_weight, maxval=init_weight)

    # --- 1) Small-B path (module-scale shapes), single-shot ----------------
    batch = 8
    prev_h = jax.random.normal(k_x, (batch, hidden_size), jnp.float32)
    pred = classifier_forward(prev_h, weight_t, bias)
    jax.block_until_ready(pred)
    ref = jax.nn.sigmoid(prev_h @ weight_t + bias)
    assert pred.shape == (batch, output_size)
    assert jnp.allclose(pred, ref, atol=1e-5, rtol=1e-5)

    # --- 2) Grid path (forced small tile to exercise the pipeline) ---------
    mid_b = 4096
    prev_h_mid = jax.random.normal(k_mid, (mid_b, hidden_size), jnp.float32)
    pred_mid = classifier_forward(prev_h_mid, weight_t, bias, block_rows=1024)
    jax.block_until_ready(pred_mid)
    ref_mid = jax.nn.sigmoid(prev_h_mid @ weight_t + bias)
    assert pred_mid.shape == (mid_b, output_size)
    assert jnp.allclose(pred_mid, ref_mid, atol=1e-5, rtol=1e-5)

    # --- 3) B not a multiple of the pack factor (pad + slice path) ---------
    odd_b = 50
    prev_h_odd = jax.random.normal(k_odd, (odd_b, hidden_size), jnp.float32)
    pred_odd = classifier_forward(prev_h_odd, weight_t, bias)
    jax.block_until_ready(pred_odd)
    ref_odd = jax.nn.sigmoid(prev_h_odd @ weight_t + bias)
    assert pred_odd.shape == (odd_b, output_size)
    assert jnp.allclose(pred_odd, ref_odd, atol=1e-5, rtol=1e-5)

    print("KERNEL_OK")
</pallas_src>

<mosaic_0001>
module attributes {stable_mosaic.version = 11 : i64} {
  func.func @classifier_kernel(%arg0: memref<1x512xf32, #tpu.memory_space<vmem>>, %arg1: memref<512x128xf32, #tpu.memory_space<vmem>>, %arg2: memref<1x128xf32, #tpu.memory_space<vmem>>, %arg3: memref<1x128xf32, #tpu.memory_space<vmem>>) attributes {dimension_semantics = [], scalar_prefetch = 0 : i64, scratch_operands = 0 : i64, tpu.core_type = #tpu.core_type<tc>} {
    %c0 = arith.constant 0 : index
    %c0_0 = arith.constant 0 : index
    %0 = vector.load %arg0[%c0, %c0_0] : memref<1x512xf32, #tpu.memory_space<vmem>>, vector<1x512xf32>
    %c0_1 = arith.constant 0 : index
    %c0_2 = arith.constant 0 : index
    %1 = vector.load %arg1[%c0_1, %c0_2] : memref<512x128xf32, #tpu.memory_space<vmem>>, vector<512x128xf32>
    %cst = arith.constant dense<0.000000e+00> : vector<1x128xf32>
    %2 = tpu.matmul %0, %1, %cst {dimension_numbers = #tpu.dot_dimension_numbers<[1], [0], [0], [1], [0, 0, 1, 1], [], []>} : vector<1x512xf32>, vector<512x128xf32>, vector<1x128xf32> -> vector<1x128xf32>
    %c0_3 = arith.constant 0 : index
    %c0_4 = arith.constant 0 : index
    %3 = vector.load %arg2[%c0_3, %c0_4] : memref<1x128xf32, #tpu.memory_space<vmem>>, vector<1x128xf32>
    %4 = arith.addf %2, %3 : vector<1x128xf32>
    %5 = arith.negf %4 : vector<1x128xf32>
    %6 = math.exp %5 : vector<1x128xf32>
    %cst_5 = arith.constant 1.000000e+00 : f32
    %7 = vector.broadcast %cst_5 : f32 to vector<1x128xf32>
    %8 = arith.addf %7, %6 : vector<1x128xf32>
    %9 = arith.divf %7, %8 : vector<1x128xf32>
    %c0_6 = arith.constant 0 : index
    %c0_7 = arith.constant 0 : index
    %10 = vector.load %arg3[%c0_6, %c0_7] : memref<1x128xf32, #tpu.memory_space<vmem>>, vector<1x128xf32>
    tpu.vector_store %arg3[%c0_6, %c0_7], %9 {strides = array<i32>} : memref<1x128xf32, #tpu.memory_space<vmem>>, vector<1x128xf32>,
    return
  }
}

</mosaic_0001>

<llo_original>
// kernel: classifier_forward.1
$region0: #{classifier_forward.1}
  #allocation0 [shape = 'u32[]', space=smem, size = 0x4, offset = 0x4, fixed_abs, tag = 'smem constant byte address 0x4 - core index']
  #allocation1 [shape = 'u32[144,128]{1,0:T(1,128)}', space=vmem, size = 0x12000, scoped, tag = 'internal scratch']
  %s0 = inlined_call_operand.vmem [shape: f32[1,512], index: 0, kind: input, shape index: {}]
  %s1 = inlined_call_operand.vmem [shape: f32[512,128], index: 1, kind: input, shape index: {}]
  %s2 = inlined_call_operand.vmem [shape: f32[1,128], index: 2, kind: input, shape index: {}]
  %s3 = inlined_call_operand.vmem [shape: f32[1,128], index: 3, kind: output, shape index: {}]
  %s4 = sld [smem:[#allocation0]]
  $region22: #{classifier_forward.1} parent=0
    _
  %s6 = ssub.s32 1, %s4
  %s7 = scalar_select 0, %s6, %s4
  // Predicated region
  $region2: #{classifier_forward.1} parent=0 // pred_check
    _
  $region3: #{classifier_forward.1} parent=0 // pred_check_branch
    %9 = sbr.rel (0) target = $region5
  $region4: #{classifier_forward.1} parent=0 // pred_region
    _
  $region5: #{classifier_forward.1} parent=0 // pred_fallthru
    _
  // Predicated region
  $region6: #{classifier_forward.1} parent=0 // pred_check
    _
  $region7: #{classifier_forward.1} parent=0 // pred_check_branch
    %11 = sbr.rel (0) target = $region9
  $region8: #{classifier_forward.1} parent=0 // pred_region
    _
  $region9: #{classifier_forward.1} parent=0 // pred_fallthru
    _
  // Predicated region
  $region10: #{classifier_forward.1} parent=0 // pred_check
    _
  $region11: #{classifier_forward.1} parent=0 // pred_check_branch
    %13 = sbr.rel (0) target = $region13
  $region12: #{classifier_forward.1} parent=0 // pred_region
    _
  $region13: #{classifier_forward.1} parent=0 // pred_fallthru
    _
  %v14 = vld [vmem:[%s0] sm:$0xf]
  %v15 = vld [vmem:[%s1] sm:$0xff]
  %v16 = vld [vmem:[%s1 + $0x8] sm:$0xff]
  %v17 = vld [vmem:[%s1 + $0x10] sm:$0xff]
  %v18 = vld [vmem:[%s1 + $0x18] sm:$0xff]
  %v19 = vld [vmem:[%s1 + $0x20] sm:$0xff]
  %v20 = vld [vmem:[%s1 + $0x28] sm:$0xff]
  %v21 = vld [vmem:[%s1 + $0x30] sm:$0xff]
  %v22 = vld [vmem:[%s1 + $0x38] sm:$0xff]
  %v23 = vld [vmem:[%s1 + $0x40] sm:$0xff]
  %v24 = vld [vmem:[%s1 + $0x48] sm:$0xff]
  %v25 = vld [vmem:[%s1 + $0x50] sm:$0xff]
  %v26 = vld [vmem:[%s1 + $0x58] sm:$0xff]
  %v27 = vld [vmem:[%s1 + $0x60] sm:$0xff]
  %v28 = vld [vmem:[%s1 + $0x68] sm:$0xff]
  %v29 = vld [vmem:[%s1 + $0x70] sm:$0xff]
  %v30 = vld [vmem:[%s1 + $0x78] sm:$0xff]
  %v31 = vld [vmem:[%s1 + $0x80] sm:$0xff]
  %v32 = vld [vmem:[%s1 + $0x88] sm:$0xff]
  %v33 = vld [vmem:[%s1 + $0x90] sm:$0xff]
  %v34 = vld [vmem:[%s1 + $0x98] sm:$0xff]
  %v35 = vld [vmem:[%s1 + $0xa0] sm:$0xff]
  %v36 = vld [vmem:[%s1 + $0xa8] sm:$0xff]
  %v37 = vld [vmem:[%s1 + $0xb0] sm:$0xff]
  %v38 = vld [vmem:[%s1 + $0xb8] sm:$0xff]
  %v39 = vld [vmem:[%s1 + $0xc0] sm:$0xff]
  %v40 = vld [vmem:[%s1 + $0xc8] sm:$0xff]
  %v41 = vld [vmem:[%s1 + $0xd0] sm:$0xff]
  %v42 = vld [vmem:[%s1 + $0xd8] sm:$0xff]
  %v43 = vld [vmem:[%s1 + $0xe0] sm:$0xff]
  %v44 = vld [vmem:[%s1 + $0xe8] sm:$0xff]
  %v45 = vld [vmem:[%s1 + $0xf0] sm:$0xff]
  %v46 = vld [vmem:[%s1 + $0xf8] sm:$0xff]
  %v47 = vld [vmem:[%s1 + $0x100] sm:$0xff]
  %v48 = vld [vmem:[%s1 + $0x108] sm:$0xff]
  %v49 = vld [vmem:[%s1 + $0x110] sm:$0xff]
  %v50 = vld [vmem:[%s1 + $0x118] sm:$0xff]
  %v51 = vld [vmem:[%s1 + $0x120] sm:$0xff]
  %v52 = vld [vmem:[%s1 + $0x128] sm:$0xff]
  %v53 = vld [vmem:[%s1 + $0x130] sm:$0xff]
  %v54 = vld [vmem:[%s1 + $0x138] sm:$0xff]
  %v55 = vld [vmem:[%s1 + $0x140] sm:$0xff]
  %v56 = vld [vmem:[%s1 + $0x148] sm:$0xff]
  %v57 = vld [vmem:[%s1 + $0x150] sm:$0xff]
  %v58 = vld [vmem:[%s1 + $0x158] sm:$0xff]
  %v59 = vld [vmem:[%s1 + $0x160] sm:$0xff]
  %v60 = vld [vmem:[%s1 + $0x168] sm:$0xff]
  %v61 = vld [vmem:[%s1 + $0x170] sm:$0xff]
  %v62 = vld [vmem:[%s1 + $0x178] sm:$0xff]
  %v63 = vld [vmem:[%s1 + $0x180] sm:$0xff]
  %v64 = vld [vmem:[%s1 + $0x188] sm:$0xff]
  %v65 = vld [vmem:[%s1 + $0x190] sm:$0xff]
  %v66 = vld [vmem:[%s1 + $0x198] sm:$0xff]
  %v67 = vld [vmem:[%s1 + $0x1a0] sm:$0xff]
  %v68 = vld [vmem:[%s1 + $0x1a8] sm:$0xff]
  %v69 = vld [vmem:[%s1 + $0x1b0] sm:$0xff]
  %v70 = vld [vmem:[%s1 + $0x1b8] sm:$0xff]
  %v71 = vld [vmem:[%s1 + $0x1c0] sm:$0xff]
  %v72 = vld [vmem:[%s1 + $0x1c8] sm:$0xff]
  %v73 = vld [vmem:[%s1 + $0x1d0] sm:$0xff]
  %v74 = vld [vmem:[%s1 + $0x1d8] sm:$0xff]
  %v75 = vld [vmem:[%s1 + $0x1e0] sm:$0xff]
  %v76 = vld [vmem:[%s1 + $0x1e8] sm:$0xff]
  %v77 = vld [vmem:[%s1 + $0x1f0] sm:$0xff]
  %v78 = vld [vmem:[%s1 + $0x1f8] sm:$0xff]
  %v79 = vld [vmem:[%s2] sm:$0x1]
  %v81 = vlaneseq
  %v82 = vshrl.u32 %v81, 7
  %v83 = vsub.s32 0, %v82
  %v84 = vrot.slane %v14, %v83
  %v85 = vlaneseq
  %v86 = vshrl.u32 %v85, 7
  %v87 = vsub.s32 1, %v86
  %v88 = vrot.slane %v14, %v87
  %v89 = vlaneseq
  %v90 = vshrl.u32 %v89, 7
  %v91 = vsub.s32 2, %v90
  %v92 = vrot.slane %v14, %v91
  %v93 = vlaneseq
  %v94 = vshrl.u32 %v93, 7
  %v95 = vsub.s32 3, %v94
  %v96 = vrot.slane %v14, %v95
  %101 = vmatprep.subr.mxu0 0.0
  %102 = vmatpush1.msra.mxu0 %v15
  %103 = vmatprep.subr.mxu0 0.0
  %104 = vmatpush1.msra.mxu0 %v16
  %105 = vmatprep.subr.mxu0 0.0
  %106 = vmatpush1.msra.mxu0 %v17
  %107 = vmatprep.subr.mxu0 0.0
  %108 = vmatpush1.msra.mxu0 %v18
  %109 = vmatprep.subr.mxu0 0.0
  %110 = vmatpush1.msra.mxu0 %v19
  %111 = vmatprep.subr.mxu0 0.0
  %112 = vmatpush1.msra.mxu0 %v20
  %113 = vmatprep.subr.mxu0 0.0
  %114 = vmatpush1.msra.mxu0 %v21
  %115 = vmatprep.subr.mxu0 0.0
  %116 = vmatpush1.msra.mxu0 %v22
  %117 = vmatprep.subr.mxu0 0.0
  %118 = vmatpush1.msra.mxu0 %v23
  %119 = vmatprep.subr.mxu0 0.0
  %120 = vmatpush1.msra.mxu0 %v24
  %121 = vmatprep.subr.mxu0 0.0
  %122 = vmatpush1.msra.mxu0 %v25
  %123 = vmatprep.subr.mxu0 0.0
  %124 = vmatpush1.msra.mxu0 %v26
  %125 = vmatprep.subr.mxu0 0.0
  %126 = vmatpush1.msra.mxu0 %v27
  %127 = vmatprep.subr.mxu0 0.0
  %128 = vmatpush1.msra.mxu0 %v28
  %129 = vmatprep.subr.mxu0 0.0
  %130 = vmatpush1.msra.mxu0 %v29
  %131 = vmatprep.subr.mxu0 0.0
  %132 = vmatpush1.msra.mxu0 %v30
  %133 = vmatprep.subr.mxu0 0.0
  %134 = vmatpush1.msra.mxu0 %v31
  %135 = vmatprep.subr.mxu0 0.0
  %136 = vmatpush1.msra.mxu0 %v32
  %137 = vmatprep.subr.mxu0 0.0
  %138 = vmatpush1.msra.mxu0 %v33
  %139 = vmatprep.subr.mxu0 0.0
  %140 = vmatpush1.msra.mxu0 %v34
  %141 = vmatprep.subr.mxu0 0.0
  %142 = vmatpush1.msra.mxu0 %v35
  %143 = vmatprep.subr.mxu0 0.0
  %144 = vmatpush1.msra.mxu0 %v36
  %145 = vmatprep.subr.mxu0 0.0
  %146 = vmatpush1.msra.mxu0 %v37
  %147 = vmatprep.subr.mxu0 0.0
  %148 = vmatpush1.msra.mxu0 %v38
  %149 = vmatprep.subr.mxu0 0.0
  %150 = vmatpush1.msra.mxu0 %v39
  %151 = vmatprep.subr.mxu0 0.0
  %152 = vmatpush1.msra.mxu0 %v40
  %153 = vmatprep.subr.mxu0 0.0
  %154 = vmatpush1.msra.mxu0 %v41
  %155 = vmatprep.subr.mxu0 0.0
  %156 = vmatpush1.msra.mxu0 %v42
  %157 = vmatprep.subr.mxu0 0.0
  %158 = vmatpush1.msra.mxu0 %v43
  %159 = vmatprep.subr.mxu0 0.0
  %160 = vmatpush1.msra.mxu0 %v44
  %161 = vmatprep.subr.mxu0 0.0
  %162 = vmatpush1.msra.mxu0 %v45
  %163 = vmatprep.subr.mxu0 0.0
  %164 = vmatpush1.msra.mxu0 %v46
  %165 = vmatprep.mubr.f32.mxu0 %v88
  %166 = vmatmul.mubr.f32.gmra.mrb[0].mxu0 %v84
  %v167 = vpop.f32.mrb[0].mxu0
  %v168 = vadd.f32 %v79, %v167
  %v169 = vpop.f32.mrb[0].mxu0
  %170 = vdwg.mxu0
  %171 = vmatprep.subr.mxu0 0.0
  %172 = vmatpush1.msra.mxu0 %v47
  %173 = vmatprep.subr.mxu0 0.0
  %174 = vmatpush1.msra.mxu0 %v48
  %175 = vmatprep.subr.mxu0 0.0
  %176 = vmatpush1.msra.mxu0 %v49
  %177 = vmatprep.subr.mxu0 0.0
  %178 = vmatpush1.msra.mxu0 %v50
  %179 = vmatprep.subr.mxu0 0.0
  %180 = vmatpush1.msra.mxu0 %v51
  %181 = vmatprep.subr.mxu0 0.0
  %182 = vmatpush1.msra.mxu0 %v52
  %183 = vmatprep.subr.mxu0 0.0
  %184 = vmatpush1.msra.mxu0 %v53
  %185 = vmatprep.subr.mxu0 0.0
  %186 = vmatpush1.msra.mxu0 %v54
  %187 = vmatprep.subr.mxu0 0.0
  %188 = vmatpush1.msra.mxu0 %v55
  %189 = vmatprep.subr.mxu0 0.0
  %190 = vmatpush1.msra.mxu0 %v56
  %191 = vmatprep.subr.mxu0 0.0
  %192 = vmatpush1.msra.mxu0 %v57
  %193 = vmatprep.subr.mxu0 0.0
  %194 = vmatpush1.msra.mxu0 %v58
  %195 = vmatprep.subr.mxu0 0.0
  %196 = vmatpush1.msra.mxu0 %v59
  %197 = vmatprep.subr.mxu0 0.0
  %198 = vmatpush1.msra.mxu0 %v60
  %199 = vmatprep.subr.mxu0 0.0
  %200 = vmatpush1.msra.mxu0 %v61
  %201 = vmatprep.subr.mxu0 0.0
  %202 = vmatpush1.msra.mxu0 %v62
  %203 = vmatprep.subr.mxu0 0.0
  %204 = vmatpush1.msra.mxu0 %v63
  %205 = vmatprep.subr.mxu0 0.0
  %206 = vmatpush1.msra.mxu0 %v64
  %207 = vmatprep.subr.mxu0 0.0
  %208 = vmatpush1.msra.mxu0 %v65
  %209 = vmatprep.subr.mxu0 0.0
  %210 = vmatpush1.msra.mxu0 %v66
  %211 = vmatprep.subr.mxu0 0.0
  %212 = vmatpush1.msra.mxu0 %v67
  %213 = vmatprep.subr.mxu0 0.0
  %214 = vmatpush1.msra.mxu0 %v68
  %215 = vmatprep.subr.mxu0 0.0
  %216 = vmatpush1.msra.mxu0 %v69
  %217 = vmatprep.subr.mxu0 0.0
  %218 = vmatpush1.msra.mxu0 %v70
  %219 = vmatprep.subr.mxu0 0.0
  %220 = vmatpush1.msra.mxu0 %v71
  %221 = vmatprep.subr.mxu0 0.0
  %222 = vmatpush1.msra.mxu0 %v72
  %223 = vmatprep.subr.mxu0 0.0
  %224 = vmatpush1.msra.mxu0 %v73
  %225 = vmatprep.subr.mxu0 0.0
  %226 = vmatpush1.msra.mxu0 %v74
  %227 = vmatprep.subr.mxu0 0.0
  %228 = vmatpush1.msra.mxu0 %v75
  %229 = vmatprep.subr.mxu0 0.0
  %230 = vmatpush1.msra.mxu0 %v76
  %231 = vmatprep.subr.mxu0 0.0
  %232 = vmatpush1.msra.mxu0 %v77
  %233 = vmatprep.subr.mxu0 0.0
  %234 = vmatpush1.msra.mxu0 %v78
  %235 = vmatprep.mubr.f32.mxu0 %v96
  %236 = vmatmul.mubr.f32.gmra.mrb[0].mxu0 %v92
  %v237 = vpop.f32.mrb[0].mxu0
  %v238 = vadd.f32 %v168, %v237
  %v239 = vpop.f32.mrb[0].mxu0
  %240 = vdwg.mxu0
  %v241 = vxor.u32 %v238, 2147483648
  %v242 = vmul.f32 %v241, 1.442695
  %v243 = vpow.pop %v242
  %v244 = vadd.f32 %v243, 1.0
  %v245 = vrcp.pop %v244
  %v246 = vmul.f32 1.0, %v245
  %247 = vst [vmem:[%s3] sm:$0x1] %v246
  // Predicated region
  $region14: #{classifier_forward.1} parent=0 // pred_check
    _
  $region15: #{classifier_forward.1} parent=0 // pred_check_branch
    %249 = sbr.rel (0) target = $region17
  $region16: #{classifier_forward.1} parent=0 // pred_region
    _
  $region17: #{classifier_forward.1} parent=0 // pred_fallthru
    _
  // Predicated region
  $region18: #{classifier_forward.1} parent=0 // pred_check
    _
  $region19: #{classifier_forward.1} parent=0 // pred_check_branch
    %251 = sbr.rel (0) target = $region21
  $region20: #{classifier_forward.1} parent=0 // pred_region
    _
  $region21: #{classifier_forward.1} parent=0 // pred_fallthru
    _

</llo_original>
